<compile_context>
chip_gen: v7x
topology: tpu7x:2x2x1
jax: 0.10.0
libtpu: 0.0.40
codegen_flags: <defaults>
</compile_context>

<pallas_src>
import functools

import jax
import jax.numpy as jnp
from jax.experimental import pallas as pl
from jax.experimental.pallas import tpu as pltpu

_TARGET_BLOCK_BYTES = 4 * 1024 * 1024   # ~4 MiB per block (x4 buffers when double-buffered)
_VMEM_LIMIT_BYTES = 32 * 1024 * 1024    # safe on v5e/v6e/v7x
_PALLAS_MIN_SIZE = 1 << 18              # below this, plain jnp is faster than a kernel launch


# ---------------------------------------------------------------------------
# Kernels
# ---------------------------------------------------------------------------
def _heaviside_kernel(x_ref, o_ref):
    x = x_ref[...]
    # g(x) = 1 if x >= 0 else 0, emitted in the input dtype (matches PyTorch forward)
    o_ref[...] = (x >= 0).astype(o_ref.dtype)


def _primitive_kernel(x_ref, o_ref, *, w, c):
    # Non-spiking path: piecewise-linear primitive function
    #   x < -w        : c*x + c*w
    #   -w <= x <= w  : x/(2w) + 1/2
    #   x > w         : c*x - c*w + 1
    x = x_ref[...]
    xf = x if x.dtype == jnp.float32 else x.astype(jnp.float32)
    inv_2w = 0.5 / w          # Python-time constant: no divide on the VPU/EUP path
    mid = xf * inv_2w + 0.5
    if c == 0.0:
        out = jnp.where(xf > w, 1.0, jnp.where(xf < -w, 0.0, mid))
    else:
        cw = c * w
        lo = c * xf + cw
        hi = c * xf + (1.0 - cw)
        out = jnp.where(xf < -w, lo, jnp.where(xf > w, hi, mid))
    o_ref[...] = out.astype(o_ref.dtype)


# ---------------------------------------------------------------------------
# Pallas dispatch helpers
# ---------------------------------------------------------------------------
def _pick_2d_view(n):
    """Choose a lane-dense 2D view [n_pad // width, width] for n elements."""
    for width in (1024, 512, 256, 128):
        if n % (8 * width) == 0:
            return n, width          # no padding needed
    width = 512
    pad_to = 8 * width
    n_pad = ((n + pad_to - 1) // pad_to) * pad_to
    return n_pad, width


def _run_elementwise(kernel_fn, x_2d, *, flops_per_elem):
    rows, width = x_2d.shape
    itemsize = jnp.dtype(x_2d.dtype).itemsize
    block_rows = (_TARGET_BLOCK_BYTES // (width * itemsize)) // 8 * 8
    block_rows = max(8, min(rows, block_rows))
    grid = (pl.cdiv(rows, block_rows),)
    nbytes = rows * width * itemsize
    cost = pl.CostEstimate(
        flops=flops_per_elem * rows * width,
        transcendentals=0,
        bytes_accessed=2 * nbytes,
    )
    return pl.pallas_call(
        kernel_fn,
        out_shape=jax.ShapeDtypeStruct(x_2d.shape, x_2d.dtype),
        grid_spec=pltpu.PrefetchScalarGridSpec(
            num_scalar_prefetch=0,
            grid=grid,
            in_specs=[pl.BlockSpec((block_rows, width), lambda i: (i, 0))],
            out_specs=pl.BlockSpec((block_rows, width), lambda i: (i, 0)),
        ),
        compiler_params=pltpu.CompilerParams(
            dimension_semantics=("parallel",),
            vmem_limit_bytes=_VMEM_LIMIT_BYTES,
        ),
        cost_estimate=cost,
    )(x_2d)


# ---------------------------------------------------------------------------
# Forward pass (module semantics)
# ---------------------------------------------------------------------------
def _primitive_ref(x, w, c):
    """Pure-jnp primitive function (used as small-input fallback and for checks)."""
    xf = x.astype(jnp.float32)
    mid = xf * (0.5 / w) + 0.5
    if c == 0.0:
        out = jnp.where(xf > w, 1.0, jnp.where(xf < -w, 0.0, mid))
    else:
        cw = c * w
        out = jnp.where(xf < -w, c * xf + cw, jnp.where(xf > w, c * xf + (1.0 - cw), mid))
    return out.astype(x.dtype)


def piecewise_leaky_relu_forward(x, w=1.0, c=0.01, spiking=True, *,
                                 force_pallas=False, pallas_min_size=_PALLAS_MIN_SIZE):
    """Forward pass of spikingjelly's PiecewiseLeakyReLU.

    spiking=True  -> heaviside(x)               (surrogate-gradient spiking fwd)
    spiking=False -> piecewise primitive function
    w, c are static Python scalars (as in the nn.Module __init__).
    """
    w = float(w)
    c = float(c)
    n = x.size
    if n == 0:
        return x

    # Tiny activations: a Pallas dispatch is pure overhead -> plain jnp.
    if (not force_pallas) and n < pallas_min_size:
        if spiking:
            return (x >= 0).astype(x.dtype)
        return _primitive_ref(x, w, c)

    orig_shape = x.shape
    n_pad, width = _pick_2d_view(n)
    flat = x.reshape(-1)                      # free for contiguous layouts
    if n_pad != n:
        flat = jnp.pad(flat, (0, n_pad - n))  # rare: only when size isn't lane-friendly
    x2d = flat.reshape(n_pad // width, width)

    if spiking:
        kernel = _heaviside_kernel
        flops_per_elem = 1
    else:
        kernel = functools.partial(_primitive_kernel, w=w, c=c)
        flops_per_elem = 4

    out2d = _run_elementwise(kernel, x2d, flops_per_elem=flops_per_elem)

    out_flat = out2d.reshape(-1)
    if n_pad != n:
        out_flat = out_flat[:n]
    return out_flat.reshape(orig_shape)       # same dtype as input; no astype copy


class PiecewiseLeakyReLU:
    """JAX/Pallas mirror of spikingjelly.clock_driven.surrogate.PiecewiseLeakyReLU (forward)."""

    # TODO(synk): backward surrogate gradient (1/w inside |x|<w, c outside) is not wired
    # up via jax.custom_vjp here; only the forward pass is implemented.
    def __init__(self, w=1.0, c=0.01, spiking=True):
        self.w = w
        self.c = c
        self.spiking = spiking

    def __call__(self, x):
        return piecewise_leaky_relu_forward(x, self.w, self.c, self.spiking)


# ---------------------------------------------------------------------------
# Demo / correctness checks
# ---------------------------------------------------------------------------
if __name__ == "__main__":
    k_small, k_big = jax.random.split(jax.random.PRNGKey(0))

    # Small NCHW-like SNN activation (module-consistent shape).
    x = jax.random.normal(k_small, (2, 4, 16, 16), dtype=jnp.float32)
    w_par, c_par = 1.0, 0.01

    # Module default path (tiny input -> jnp fallback by design).
    mod = PiecewiseLeakyReLU(w=w_par, c=c_par, spiking=True)
    y = jax.block_until_ready(mod(x))
    ref = (x >= 0).astype(x.dtype)
    assert y.shape == x.shape and y.dtype == x.dtype
    assert bool(jnp.all(y == ref))

    # Force the Pallas kernels on the small input to exercise both code paths.
    y_spk = jax.block_until_ready(
        piecewise_leaky_relu_forward(x, w_par, c_par, True, force_pallas=True))
    assert bool(jnp.all(y_spk == ref))

    y_prim = jax.block_until_ready(
        piecewise_leaky_relu_forward(x, w_par, c_par, False, force_pallas=True))
    m0 = (x < -w_par).astype(jnp.float32)
    m1 = (x > w_par).astype(jnp.float32)
    m2 = 1.0 - m0 - m1
    ref_prim = (m0 * (c_par * x + c_par * w_par)
                + m1 * (c_par * x + (-c_par * w_par + 1.0))
                + m2 * (x / (2 * w_par) + 0.5))
    assert bool(jnp.allclose(y_prim, ref_prim, atol=1e-6))

    # Larger activation: auto path dispatches the Pallas kernel with big (~4 MiB) blocks.
    xb = jax.random.normal(k_big, (8, 64, 64, 64), dtype=jnp.float32)  # 2M elems, no padding
    yb = jax.block_until_ready(piecewise_leaky_relu_forward(xb, w_par, c_par, True))
    assert bool(jnp.all(yb == (xb >= 0).astype(xb.dtype)))

    yb2 = jax.block_until_ready(piecewise_leaky_relu_forward(xb, w_par, c_par, False))
    mb0 = (xb < -w_par).astype(jnp.float32)
    mb1 = (xb > w_par).astype(jnp.float32)
    mb2 = 1.0 - mb0 - mb1
    ref_b2 = (mb0 * (c_par * xb + c_par * w_par)
              + mb1 * (c_par * xb + (-c_par * w_par + 1.0))
              + mb2 * (xb / (2 * w_par) + 0.5))
    assert bool(jnp.allclose(yb2, ref_b2, atol=1e-6))

    print("KERNEL_OK")
</pallas_src>

<mosaic_0001>
module attributes {stable_mosaic.version = 11 : i64} {
  func.func @_heaviside_kernel(%arg0: i32, %arg1: memref<8x256xf32, #tpu.memory_space<vmem>>, %arg2: memref<8x256xf32, #tpu.memory_space<vmem>>) attributes {dimension_semantics = [#tpu.dimension_semantics<parallel>], iteration_bounds = array<i64: 1>, scalar_prefetch = 0 : i64, scratch_operands = 0 : i64, tpu.core_type = #tpu.core_type<tc>, window_params = [{transform_indices = @transform_0, window_bounds = array<i64: 8, 256>}, {transform_indices = @transform_1, window_bounds = array<i64: 8, 256>}]} {
    %c0 = arith.constant 0 : index
    %c0_0 = arith.constant 0 : index
    %0 = vector.load %arg1[%c0, %c0_0] : memref<8x256xf32, #tpu.memory_space<vmem>>, vector<8x256xf32>
    %cst = arith.constant 0.000000e+00 : f32
    %1 = vector.broadcast %cst : f32 to vector<8x256xf32>
    %2 = arith.cmpf oge, %0, %1 : vector<8x256xf32>
    %3 = arith.extui %2 : vector<8x256xi1> to vector<8x256xi32>
    %4 = arith.sitofp %3 : vector<8x256xi32> to vector<8x256xf32>
    %c0_1 = arith.constant 0 : index
    %c0_2 = arith.constant 0 : index
    %5 = vector.load %arg2[%c0_1, %c0_2] : memref<8x256xf32, #tpu.memory_space<vmem>>, vector<8x256xf32>
    tpu.vector_store %arg2[%c0_1, %c0_2], %4 {strides = array<i32>} : memref<8x256xf32, #tpu.memory_space<vmem>>, vector<8x256xf32>,
    return
  }
  func.func @transform_0(%arg0: i32) -> (i32, i32) {
    %c0_i32 = arith.constant 0 : i32
    %c0_i32_0 = arith.constant 0 : i32
    return %arg0, %c0_i32 : i32, i32
  }
  func.func @transform_1(%arg0: i32) -> (i32, i32) {
    %c0_i32 = arith.constant 0 : i32
    %c0_i32_0 = arith.constant 0 : i32
    return %arg0, %c0_i32 : i32, i32
  }
}

</mosaic_0001>

<llo_original>
// kernel: tpu_custom_call.1
$region0: #{tpu_custom_call.1}
  #allocation0 [shape = 'u32[]', space=smem, size = 0x4, offset = 0x4, fixed_abs, tag = 'smem constant byte address 0x4 - core index']
  #allocation1 [shape = 'u32[144,128]{1,0:T(1,128)}', space=vmem, size = 0x12000, scoped, tag = 'internal scratch']
  %s0 = inlined_call_operand.hbm [shape: f32[8,256], index: 0, kind: input, shape index: {}]
  %s1 = inlined_call_operand.hbm [shape: f32[8,256], index: 1, kind: output, shape index: {}]
  %s2 = sld [smem:[#allocation0]]
  $region18: #{tpu_custom_call.1} parent=0
    _
  %s4 = ssub.s32 1, %s2
  %s5 = scalar_select 0, %s4, %s2
  $region1: #{tpu_custom_call.1} parent=0
    #allocation2 [shape = 'u8[8192]{0}', space=vmem, size = 0x2000, scoped, tag = 'input window, operand 0, single buffered']
    #allocation3 [shape = 's32[1]{0}', space=sflag, size = 0x4, scoped, tag = 'scoped memory for tpu_custom_call.1']
    #allocation4 [shape = 's32[1]{0}', space=sflag, size = 0x4, scoped, tag = 'scoped memory for tpu_custom_call.1']
    #allocation5 [shape = 'u8[8192]{0}', space=vmem, size = 0x2000, scoped, tag = 'output window, operand 0, single buffered']
    %6 = vsyncpa [#allocation3], 0
    %7 = vsyncpa [#allocation4], 0
    // Predicated region
    $region2: #{tpu_custom_call.1} parent=1 // pred_check
      _
    $region3: #{tpu_custom_call.1} parent=1 // pred_check_branch
      %9 = sbr.rel (0) target = $region5
    $region4: #{tpu_custom_call.1} parent=1 // pred_region
      %s11 = ssub.s32 256, 256
      %12 = vsyncadd [#allocation3], %s11
      %s14 = sshll.u32 [#allocation2], 4
      %s15 = int_to_ptr.vmem [resolvable:$true] %s14
      %17 = dma.hbm_to_vmem [thread:$0]  %s0, 256, %s15, [#allocation3]
    $region5: #{tpu_custom_call.1} parent=1 // pred_fallthru
      _
    // Predicated region
    $region6: #{tpu_custom_call.1} parent=1 // pred_check
      _
    $region7: #{tpu_custom_call.1} parent=1 // pred_check_branch
      %19 = sbr.rel (0) target = $region9
    $region8: #{tpu_custom_call.1} parent=1 // pred_region
      %20 = dma.done [#allocation3], 256
    $region9: #{tpu_custom_call.1} parent=1 // pred_fallthru
      _
    %v21 = vld [vmem:[#allocation2] sm:$0xff]
    %v22 = vld [vmem:[#allocation2 + $0x8] sm:$0xff]
    %vm23 = vcmp.ge.f32.partialorder %v21, 0.0
    %vm24 = vcmp.ge.f32.partialorder %v22, 0.0
    %v25 = vsel %vm23, 1, 0
    %v26 = vsel %vm24, 1, 0
    %v27 = vcvt.s32.f32 %v25
    %v28 = vcvt.s32.f32 %v26
    %29 = vst [vmem:[#allocation5] sm:$0xff] %v27
    %30 = vst [vmem:[#allocation5 + $0x8] sm:$0xff] %v28
    // Predicated region
    $region10: #{tpu_custom_call.1} parent=1 // pred_check
      _
    $region11: #{tpu_custom_call.1} parent=1 // pred_check_branch
      %32 = sbr.rel (0) target = $region13
    $region12: #{tpu_custom_call.1} parent=1 // pred_region
      %s34 = ssub.s32 256, 256
      %35 = vsyncadd [#allocation4], %s34
      %s37 = sshll.u32 [#allocation5], 4
      %s38 = int_to_ptr.vmem [resolvable:$true] %s37
      %40 = dma.vmem_to_hbm [thread:$0]  %s38, 256, %s1, [#allocation4]
    $region13: #{tpu_custom_call.1} parent=1 // pred_fallthru
      _
    // Predicated region
    $region14: #{tpu_custom_call.1} parent=1 // pred_check
      _
    $region15: #{tpu_custom_call.1} parent=1 // pred_check_branch
      %42 = sbr.rel (0) target = $region17
    $region16: #{tpu_custom_call.1} parent=1 // pred_region
      %43 = dma.done [#allocation4], 256
    $region17: #{tpu_custom_call.1} parent=1 // pred_fallthru
      _
    %44 = vsyncpa [#allocation3], 1
    %45 = vsyncpa [#allocation4], 1

</llo_original>
